<compile_context>
chip_gen: v7x
topology: tpu7x:2x2x1
jax: 0.10.0
libtpu: 0.0.40
codegen_flags: <defaults>
</compile_context>

<pallas_src>
import functools

import jax
import jax.numpy as jnp
from jax.experimental import pallas as pl
from jax.experimental.pallas import tpu as pltpu


def _contrastive_loss_kernel(y1_ref, y2_ref, d_ref, out_ref, *,
                             m, batch, block_b, steps_per_part):
    p = pl.program_id(0)  # parallel part (megacore split on v7x)
    j = pl.program_id(1)  # reduction step inside this part ("arbitrary")

    # Zero this part's accumulator block at the start of its sweep.
    @pl.when(j == 0)
    def _():
        out_ref[...] = jnp.zeros_like(out_ref)

    # Inputs arrive in native dtype; upcast on-chip.
    y1 = y1_ref[...].astype(jnp.float32)          # (block_b, D)
    y2 = y2_ref[...].astype(jnp.float32)          # (block_b, D)
    labels = d_ref[...]                           # (block_b, 1) int32

    eps = jnp.float32(1e-6)                       # F.pairwise_distance default eps
    diff = y1 - y2 + eps
    sqdist = jnp.sum(diff * diff, axis=-1, keepdims=True)   # (block_b, 1)
    euc = jnp.sqrt(sqdist)                                    # EUP slot, ~free
    delta = jnp.maximum(jnp.float32(m) - euc, 0.0)

    # d==0 rows contribute euc^2 (== sqdist), d==1 rows contribute clamp(m-euc,0)^2.
    per_row = jnp.where(labels == 0, sqdist, delta * delta)  # labels assumed in {0,1}

    # Mask rows of a ragged last block (block may extend past B).
    block_start = (p * steps_per_part + j) * block_b
    row_ids = block_start + jax.lax.broadcasted_iota(jnp.int32, (block_b, 1), 0)
    per_row = jnp.where(row_ids < batch, per_row, 0.0)

    # Accumulate the partial sum into every element of this part's (8,128) block.
    out_ref[...] += jnp.sum(per_row)


def _choose_block_b(batch, dim, itemsize):
    # Cap each input tile at ~2 MiB: 2 inputs x 2 pipeline buffers x 2 MiB = 8 MiB,
    # comfortably inside the scoped-VMEM default on every generation (incl. v7x).
    budget_bytes = 2 * 1024 * 1024
    tb = max(8, budget_bytes // max(1, dim * itemsize))
    tb = min(tb, batch)
    if tb != batch:
        tb = max(8, (tb // 8) * 8)   # keep the second-minor block dim 8-aligned
    return min(tb, batch)


def contrastive_loss(y1, y2, d, m=2.0, block_b=None):
    """y1, y2: [B, D] float (any dtype); d: [B] int labels in {0,1}. Scalar f32 loss."""
    batch, dim = y1.shape
    d2 = d.reshape(batch, 1).astype(jnp.int32)
    itemsize = jnp.dtype(y1.dtype).itemsize

    if block_b is None:
        block_b = _choose_block_b(batch, dim, itemsize)
    else:
        block_b = min(block_b, batch)
        if block_b != batch:
            block_b = max(8, (block_b // 8) * 8)
        block_b = min(block_b, batch)

    total_steps = pl.cdiv(batch, block_b)
    # Use both TensorCores (v7x) only when the work splits exactly and is big enough
    # to amortize the per-step overhead; otherwise one serial sweep.
    num_parts = 2 if (total_steps >= 4 and total_steps % 2 == 0) else 1
    steps_per_part = total_steps // num_parts

    kernel = functools.partial(
        _contrastive_loss_kernel,
        m=float(m), batch=batch, block_b=block_b, steps_per_part=steps_per_part)

    cost = pl.CostEstimate(
        flops=4 * batch * dim,
        transcendentals=batch,
        bytes_accessed=2 * batch * dim * itemsize + batch * 4 + num_parts * 8 * 128 * 4)

    partials = pl.pallas_call(
        kernel,
        out_shape=jax.ShapeDtypeStruct((num_parts * 8, 128), jnp.float32),
        grid_spec=pltpu.PrefetchScalarGridSpec(
            num_scalar_prefetch=0,
            grid=(num_parts, steps_per_part),
            in_specs=[
                pl.BlockSpec((block_b, dim),
                             lambda p, j: (p * steps_per_part + j, 0)),
                pl.BlockSpec((block_b, dim),
                             lambda p, j: (p * steps_per_part + j, 0)),
                pl.BlockSpec((block_b, 1),
                             lambda p, j: (p * steps_per_part + j, 0)),
            ],
            out_specs=pl.BlockSpec((8, 128), lambda p, j: (p, 0)),
        ),
        compiler_params=pltpu.CompilerParams(
            dimension_semantics=("parallel", "arbitrary")),
        cost_estimate=cost,
    )(y1, y2, d2)

    # Every element of a part's block holds that part's partial sum; take one per part.
    part_sums = partials[0::8, 0]                  # (num_parts,)
    return jnp.sum(part_sums) * jnp.float32(1.0 / batch)


def contrastive_loss_ref(y1, y2, d, m=2.0):
    """Pure-JAX reference mirroring the PyTorch forward()."""
    eps = 1e-6
    euc = jnp.sqrt(jnp.sum((y1.astype(jnp.float32) - y2.astype(jnp.float32) + eps) ** 2,
                           axis=-1))
    zero_mask = d == 0
    one_mask = d == 1
    zf = zero_mask.astype(jnp.float32)
    of = one_mask.astype(jnp.float32)
    d_zero_mean = jnp.sum(euc**2 * zf) / jnp.sum(zf)
    delta = jnp.maximum(m - euc, 0.0)
    d_one_mean = jnp.sum(delta**2 * of) / jnp.sum(of)
    losses = jnp.where(zero_mask, d_zero_mean, d_one_mean)
    return jnp.mean(losses)


if __name__ == "__main__":
    key = jax.random.PRNGKey(0)
    k1, k2 = jax.random.split(key)

    B, D = 8, 32
    y1 = jax.random.normal(k1, (B, D), dtype=jnp.float32)
    y2 = jax.random.normal(k2, (B, D), dtype=jnp.float32)
    d = jnp.array([0, 1, 0, 1, 1, 0, 0, 1], dtype=jnp.int32)  # mix of 0s and 1s

    loss = contrastive_loss(y1, y2, d, m=2.0)
    jax.block_until_ready(loss)
    ref = contrastive_loss_ref(y1, y2, d, m=2.0)
    assert jnp.allclose(loss, ref, rtol=1e-5, atol=1e-5), (loss, ref)

    # Exercise the tiled + ragged-batch path: B=20 with block_b=8 -> 3 blocks, last partial.
    B2 = 20
    y1b = jax.random.normal(jax.random.PRNGKey(1), (B2, D), dtype=jnp.float32)
    y2b = jax.random.normal(jax.random.PRNGKey(2), (B2, D), dtype=jnp.float32)
    db = (jnp.arange(B2) % 2).astype(jnp.int32)
    loss2 = contrastive_loss(y1b, y2b, db, m=2.0, block_b=8)
    jax.block_until_ready(loss2)
    ref2 = contrastive_loss_ref(y1b, y2b, db, m=2.0)
    assert jnp.allclose(loss2, ref2, rtol=1e-5, atol=1e-5), (loss2, ref2)

    print("KERNEL_OK")
</pallas_src>

<mosaic_0001>
module attributes {stable_mosaic.version = 11 : i64} {
  func.func @_contrastive_loss_kernel(%arg0: i32, %arg1: i32, %arg2: memref<8x32xf32, #tpu.memory_space<vmem>>, %arg3: memref<8x32xf32, #tpu.memory_space<vmem>>, %arg4: memref<8x1xi32, #tpu.memory_space<vmem>>, %arg5: memref<8x128xf32, #tpu.memory_space<vmem>>) attributes {dimension_semantics = [#tpu.dimension_semantics<parallel>, #tpu.dimension_semantics<arbitrary>], iteration_bounds = array<i64: 1, 1>, scalar_prefetch = 0 : i64, scratch_operands = 0 : i64, tpu.core_type = #tpu.core_type<tc>, window_params = [{transform_indices = @transform_0, window_bounds = array<i64: 8, 32>}, {transform_indices = @transform_1, window_bounds = array<i64: 8, 32>}, {transform_indices = @transform_2, window_bounds = array<i64: 8, 1>}, {transform_indices = @transform_3, window_bounds = array<i64: 8, 128>}]} {
    %c0_i32 = arith.constant 0 : i32
    %0 = arith.cmpi eq, %arg1, %c0_i32 : i32
    %1 = arith.extui %0 : i1 to i32
    %c0_i32_0 = arith.constant 0 : i32
    %2 = arith.cmpi ne, %1, %c0_i32_0 : i32
    scf.if %2 {
      %cst_17 = arith.constant 0.000000e+00 : f32
      %39 = vector.broadcast %cst_17 : f32 to vector<8x128xf32>
      %c0_18 = arith.constant 0 : index
      %c0_19 = arith.constant 0 : index
      %40 = vector.load %arg5[%c0_18, %c0_19] : memref<8x128xf32, #tpu.memory_space<vmem>>, vector<8x128xf32>
      tpu.vector_store %arg5[%c0_18, %c0_19], %39 {strides = array<i32>} : memref<8x128xf32, #tpu.memory_space<vmem>>, vector<8x128xf32>,
    } else {
    }
    %c0 = arith.constant 0 : index
    %c0_1 = arith.constant 0 : index
    %3 = vector.load %arg2[%c0, %c0_1] : memref<8x32xf32, #tpu.memory_space<vmem>>, vector<8x32xf32>
    %c0_2 = arith.constant 0 : index
    %c0_3 = arith.constant 0 : index
    %4 = vector.load %arg3[%c0_2, %c0_3] : memref<8x32xf32, #tpu.memory_space<vmem>>, vector<8x32xf32>
    %c0_4 = arith.constant 0 : index
    %c0_5 = arith.constant 0 : index
    %5 = vector.load %arg4[%c0_4, %c0_5] : memref<8x1xi32, #tpu.memory_space<vmem>>, vector<8x1xi32>
    %6 = arith.subf %3, %4 : vector<8x32xf32>
    %cst = arith.constant 9.99999997E-7 : f32
    %7 = vector.broadcast %cst : f32 to vector<8x32xf32>
    %8 = arith.addf %6, %7 : vector<8x32xf32>
    %9 = arith.mulf %8, %8 : vector<8x32xf32>
    %cst_6 = arith.constant dense<0.000000e+00> : vector<8xf32>
    %10 = vector.multi_reduction <add>, %9, %cst_6 [1] : vector<8x32xf32> to vector<8xf32>
    %11 = vector.shape_cast %10 : vector<8xf32> to vector<8x1xf32>
    %12 = math.sqrt %11 : vector<8x1xf32>
    %cst_7 = arith.constant 2.000000e+00 : f32
    %13 = vector.broadcast %cst_7 : f32 to vector<8x1xf32>
    %14 = arith.subf %13, %12 : vector<8x1xf32>
    %cst_8 = arith.constant 0.000000e+00 : f32
    %15 = vector.broadcast %cst_8 : f32 to vector<8x1xf32>
    %16 = arith.maximumf %14, %15 : vector<8x1xf32>
    %c0_i32_9 = arith.constant 0 : i32
    %17 = vector.broadcast %c0_i32_9 : i32 to vector<8x1xi32>
    %18 = arith.cmpi eq, %5, %17 : vector<8x1xi32>
    %19 = arith.mulf %16, %16 : vector<8x1xf32>
    %20 = arith.select %18, %11, %19 : vector<8x1xi1>, vector<8x1xf32>
    %c1_i32 = arith.constant 1 : i32
    %21 = arith.muli %arg0, %c1_i32 : i32
    %22 = arith.addi %21, %arg1 : i32
    %c8_i32 = arith.constant 8 : i32
    %23 = arith.muli %22, %c8_i32 : i32
    %24 = tpu.iota {dimensions = array<i32: 0>} : vector<8x1xi32>
    %25 = vector.broadcast %23 : i32 to vector<8x1xi32>
    %26 = arith.addi %25, %24 : vector<8x1xi32>
    %c8_i32_10 = arith.constant 8 : i32
    %27 = vector.broadcast %c8_i32_10 : i32 to vector<8x1xi32>
    %28 = arith.cmpi slt, %26, %27 : vector<8x1xi32>
    %cst_11 = arith.constant 0.000000e+00 : f32
    %29 = vector.broadcast %cst_11 : f32 to vector<8x1xf32>
    %30 = arith.select %28, %20, %29 : vector<8x1xi1>, vector<8x1xf32>
    %c0_12 = arith.constant 0 : index
    %c0_13 = arith.constant 0 : index
    %31 = vector.load %arg5[%c0_12, %c0_13] : memref<8x128xf32, #tpu.memory_space<vmem>>, vector<8x128xf32>
    %32 = vector.shape_cast %30 : vector<8x1xf32> to vector<1x8x1xf32>
    %cst_14 = arith.constant dense<0.000000e+00> : vector<1xf32>
    %33 = vector.multi_reduction <add>, %32, %cst_14 [1, 2] : vector<1x8x1xf32> to vector<1xf32>
    %34 = vector.shape_cast %33 : vector<1xf32> to vector<1x1x1xf32>
    %35 = vector.extract %34[0, 0, 0] : f32 from vector<1x1x1xf32>
    %36 = vector.broadcast %35 : f32 to vector<8x128xf32>
    %37 = arith.addf %31, %36 : vector<8x128xf32>
    %c0_15 = arith.constant 0 : index
    %c0_16 = arith.constant 0 : index
    %38 = vector.load %arg5[%c0_15, %c0_16] : memref<8x128xf32, #tpu.memory_space<vmem>>, vector<8x128xf32>
    tpu.vector_store %arg5[%c0_15, %c0_16], %37 {strides = array<i32>} : memref<8x128xf32, #tpu.memory_space<vmem>>, vector<8x128xf32>,
    return
  }
  func.func @transform_0(%arg0: i32, %arg1: i32) -> (i32, i32) {
    %c1_i32 = arith.constant 1 : i32
    %0 = arith.muli %arg0, %c1_i32 : i32
    %1 = arith.addi %0, %arg1 : i32
    %c0_i32 = arith.constant 0 : i32
    %c0_i32_0 = arith.constant 0 : i32
    return %1, %c0_i32 : i32, i32
  }
  func.func @transform_1(%arg0: i32, %arg1: i32) -> (i32, i32) {
    %c1_i32 = arith.constant 1 : i32
    %0 = arith.muli %arg0, %c1_i32 : i32
    %1 = arith.addi %0, %arg1 : i32
    %c0_i32 = arith.constant 0 : i32
    %c0_i32_0 = arith.constant 0 : i32
    return %1, %c0_i32 : i32, i32
  }
  func.func @transform_2(%arg0: i32, %arg1: i32) -> (i32, i32) {
    %c1_i32 = arith.constant 1 : i32
    %0 = arith.muli %arg0, %c1_i32 : i32
    %1 = arith.addi %0, %arg1 : i32
    %c0_i32 = arith.constant 0 : i32
    %c0_i32_0 = arith.constant 0 : i32
    return %1, %c0_i32 : i32, i32
  }
  func.func @transform_3(%arg0: i32, %arg1: i32) -> (i32, i32) {
    %c0_i32 = arith.constant 0 : i32
    %c0_i32_0 = arith.constant 0 : i32
    return %arg0, %c0_i32 : i32, i32
  }
}

</mosaic_0001>

<llo_original>
// kernel: tpu_custom_call.1
$region0: #{tpu_custom_call.1}
  #allocation0 [shape = 'u32[]', space=smem, size = 0x4, offset = 0x4, fixed_abs, tag = 'smem constant byte address 0x4 - core index']
  #allocation1 [shape = 'u32[144,128]{1,0:T(1,128)}', space=vmem, size = 0x12000, scoped, tag = 'internal scratch']
  %s0 = inlined_call_operand.vmem [shape: f32[8,32], index: 0, kind: input, shape index: {}]
  %s1 = inlined_call_operand.hbm [shape: f32[8,32], index: 1, kind: input, shape index: {}]
  %s2 = inlined_call_operand.vmem [shape: s32[8,1], index: 2, kind: input, shape index: {}]
  %s3 = inlined_call_operand.hbm [shape: f32[8,128], index: 3, kind: output, shape index: {}]
  %s4 = sld [smem:[#allocation0]]
  $region30: #{tpu_custom_call.1} parent=0
    _
  %s6 = ssub.s32 1, %s4
  %s7 = scalar_select 0, %s6, %s4
  $region1: #{tpu_custom_call.1} parent=0
    #allocation2 [shape = 'u8[4096]{0}', space=vmem, size = 0x1000, scoped, tag = 'input window, operand 1, single buffered']
    #allocation3 [shape = 's32[1]{0}', space=sflag, size = 0x4, scoped, tag = 'scoped memory for tpu_custom_call.1']
    #allocation4 [shape = 's32[1]{0}', space=sflag, size = 0x4, scoped, tag = 'scoped memory for tpu_custom_call.1']
    #allocation5 [shape = 'u8[4096]{0}', space=vmem, size = 0x1000, scoped, tag = 'output window, operand 0, single buffered']
    %8 = vsyncpa [#allocation3], 0
    %9 = vsyncpa [#allocation4], 0
    // Predicated region
    $region2: #{tpu_custom_call.1} parent=1 // pred_check
      _
    $region3: #{tpu_custom_call.1} parent=1 // pred_check_branch
      %11 = sbr.rel (0) target = $region5
    $region4: #{tpu_custom_call.1} parent=1 // pred_region
      %s12 = sadd.s32 0, 0
      %p13 = scmp.lt.s32.totalorder %s12, 0
      %s14 = scalar_select %p13, %s12, 0
      %s15 = smul.addr %s14, 8
      %s16 = scalar_lea.vmem %s0, %s15
      %s17 = sadd.s32 0, 0
    $region5: #{tpu_custom_call.1} parent=1 // pred_fallthru
      _
    // Predicated region
    $region6: #{tpu_custom_call.1} parent=1 // pred_check
      _
    $region7: #{tpu_custom_call.1} parent=1 // pred_check_branch
      %19 = sbr.rel (0) target = $region9
    $region8: #{tpu_custom_call.1} parent=1 // pred_region
      %s20 = sadd.s32 0, 0
      %s22 = ssub.s32 128, 128
      %23 = vsyncadd [#allocation3], %s22
      %s24 = smul.addr %s20, 128
      %s25 = scalar_lea.hbm %s1, %s24
      %s27 = sshll.u32 [#allocation2], 4
      %s28 = int_to_ptr.vmem [resolvable:$true] %s27
      %30 = dma.hbm_to_vmem [thread:$0]  %s25, 128, %s28, [#allocation3]
    $region9: #{tpu_custom_call.1} parent=1 // pred_fallthru
      _
    // Predicated region
    $region10: #{tpu_custom_call.1} parent=1 // pred_check
      _
    $region11: #{tpu_custom_call.1} parent=1 // pred_check_branch
      %32 = sbr.rel (0) target = $region13
    $region12: #{tpu_custom_call.1} parent=1 // pred_region
      %s33 = sadd.s32 0, 0
      %p34 = scmp.lt.s32.totalorder %s33, 0
      %s35 = scalar_select %p34, %s33, 0
      %s36 = smul.addr %s35, 8
      %s37 = scalar_lea.vmem %s2, %s36
      %s38 = sadd.s32 0, 0
    $region13: #{tpu_custom_call.1} parent=1 // pred_fallthru
      _
    // Predicated region
    $region14: #{tpu_custom_call.1} parent=1 // pred_check
      _
    $region15: #{tpu_custom_call.1} parent=1 // pred_check_branch
      %40 = sbr.rel (0) target = $region17
    $region16: #{tpu_custom_call.1} parent=1 // pred_region
      %41 = dma.done [#allocation3], 128
    $region17: #{tpu_custom_call.1} parent=1 // pred_fallthru
      _
    %s42 = sadd.s32 0, 0
    %p43 = scmp.lt.s32.totalorder %s42, 0
    %s44 = scalar_select %p43, %s42, 0
    %s45 = smul.addr %s44, 8
    %s46 = scalar_lea.vmem %s0, %s45
    %s47 = sadd.s32 0, 0
    %p48 = scmp.lt.s32.totalorder %s47, 0
    %s49 = scalar_select %p48, %s47, 0
    %s50 = smul.addr %s49, 8
    %s51 = scalar_lea.vmem %s2, %s50
    %s52 = sadd.s32 0, 0
    %p53 = scmp.lt.s32.totalorder %s52, 0
    %s54 = scalar_select %p53, %s52, 0
    %s55 = smul.addr %s54, 8
    %s56 = scalar_lea.vmem %s0, %s55
    %s57 = sadd.s32 0, 0
    %s58 = sadd.s32 0, 0
    %s59 = sadd.s32 0, 0
    %p60 = scmp.lt.s32.totalorder %s59, 0
    %s61 = scalar_select %p60, %s59, 0
    %s62 = smul.addr %s61, 8
    %s63 = scalar_lea.vmem %s2, %s62
    %s64 = sadd.s32 0, 0
    %p65 = scmp.eq.s32.totalorder 0, 0
    // Predicated region
    $region18: #{tpu_custom_call.1} parent=1 // pred_check
      %p66 = pneg %p65
    $region19: #{tpu_custom_call.1} parent=1 // pred_check_branch
      %68 = sbr.rel (%p66) target = $region21
    $region20: #{tpu_custom_call.1} parent=1 // pred_region
      %69 = vst [vmem:[#allocation5] sm:$0xff] 0.0
    $region21: #{tpu_custom_call.1} parent=1 // pred_fallthru
      _
    %v70 = vld [vmem:[%s56] sm:$0xff]
    %v71 = vld [vmem:[#allocation2] sm:$0xff]
    %v72 = vld [vmem:[%s63] sm:$0xff]
    %v73 = vsub.f32 %v70, %v71
    %v74 = vadd.f32 %v73, 1e-06
    %v75 = vmul.f32 %v74, %v74
    %vm76 = vcmask 261120
    %v77 = vsel %vm76, %v75, 0.0
    %78 = vadd.xlane.f32.xlu0 %v77
    %v79 = vpop.xlane.xlu0 %78
    %v80 = vrsqrt.pop %v79
    %v81 = vmul.f32 %v79, %v80
    %vm82 = vcmp.eq.f32.partialorder %v79, inf
    %v83 = vsel %vm82, %v79, %v81
    %vm84 = vcmp.eq.f32.partialorder %v79, 0.0
    %v85 = vand.u32 %v79, 2147483648
    %v86 = vsel %vm84, %v85, %v83
    %v87 = vsub.f32 2.0, %v86
    %v88 = vmax.f32 %v87, 0.0
    %vm89 = vcmp.eq.s32.totalorder %v72, 0
    %v90 = vmul.f32 %v88, %v88
    %v91 = vsel %vm89, %v79, %v90
    %s92 = sadd.s32 0, 0
    %s93 = smul.u32 %s92, 8
    %v94 = vlaneseq
    %v95 = vshrl.u32 %v94, 7
    %v96 = vstv %s93
    %v97 = vadd.s32 %v96, %v95
    %vm98 = vcmp.lt.s32.totalorder %v97, 8
    %v99 = vsel %vm98, %v91, 0.0
    %v100 = vld [vmem:[#allocation5] sm:$0xff]
    %vm101 = vcmask 7168
    %v102 = vsel %vm101, %v99, 0.0
    %103 = vadd.xlane.f32.xlu0 %v102
    %v104 = vpop.xlane.xlu0 %103
    %v105 = vrot.slane %v104, 4
    %v106 = vadd.f32 %v104, %v105
    %v107 = vrot.slane %v106, 2
    %v108 = vadd.f32 %v106, %v107
    %v109 = vrot.slane %v108, 1
    %v110 = vadd.f32 %v108, %v109
    %s111 = vtos %v110
    %v112 = vstv %s111
    %v113 = vadd.f32 %v100, %v112
    %114 = vst [vmem:[#allocation5] sm:$0xff] %v113
    // Predicated region
    $region22: #{tpu_custom_call.1} parent=1 // pred_check
      _
    $region23: #{tpu_custom_call.1} parent=1 // pred_check_branch
      %116 = sbr.rel (0) target = $region25
    $region24: #{tpu_custom_call.1} parent=1 // pred_region
      %s118 = ssub.s32 128, 128
      %119 = vsyncadd [#allocation4], %s118
      %s121 = sshll.u32 [#allocation5], 4
      %s122 = int_to_ptr.vmem [resolvable:$true] %s121
      %124 = dma.vmem_to_hbm [thread:$0]  %s122, 128, %s3, [#allocation4]
    $region25: #{tpu_custom_call.1} parent=1 // pred_fallthru
      _
    // Predicated region
    $region26: #{tpu_custom_call.1} parent=1 // pred_check
      _
    $region27: #{tpu_custom_call.1} parent=1 // pred_check_branch
      %126 = sbr.rel (0) target = $region29
    $region28: #{tpu_custom_call.1} parent=1 // pred_region
      %127 = dma.done [#allocation4], 128
    $region29: #{tpu_custom_call.1} parent=1 // pred_fallthru
      _
    %128 = vsyncpa [#allocation3], 1
    %129 = vsyncpa [#allocation4], 1

</llo_original>
